<compile_context>
chip_gen: v7x
topology: tpu7x:2x2x1
jax: 0.10.0
libtpu: 0.0.40
codegen_flags: <defaults>
</compile_context>

<pallas_src>
import jax
import jax.numpy as jnp
from jax import lax
from jax.experimental import pallas as pl
from jax.experimental.pallas import tpu as pltpu

HIDDEN = 768
EPS = 1e-12


def add_layernorm_kernel(a_ref, b_ref, gamma_ref, beta_ref, o_ref):
    # a_ref/b_ref/o_ref: (TM, HIDDEN); gamma_ref/beta_ref: (1, HIDDEN) f32.
    x = a_ref[...].astype(jnp.float32) + b_ref[...].astype(jnp.float32)

    inv_h = jnp.float32(1.0 / HIDDEN)
    mean = jnp.sum(x, axis=-1, keepdims=True) * inv_h            # (TM, 1)
    xc = x - mean                                                # (TM, HIDDEN)
    var = jnp.sum(xc * xc, axis=-1, keepdims=True) * inv_h       # (TM, 1)
    inv = lax.rsqrt(var + jnp.float32(EPS))                      # (TM, 1)

    # Direct affine epilogue: no (TM, HIDDEN) scale/shift temporaries.
    o_ref[...] = ((xc * inv) * gamma_ref[...] + beta_ref[...]).astype(o_ref.dtype)


def _round_up(x, m):
    return ((x + m - 1) // m) * m


def _pick_tile_rows(rows, *, max_tile_rows=512, min_tile_rows=64, target_steps=4):
    """Tile-row heuristic:
       - aim for ~target_steps grid steps (>=2) so double-buffering overlaps
         DMA with compute and both v7x TensorCores get work,
       - multiple of 16 rows (bf16 packs 2 rows per sublane),
       - clamp to [min_tile_rows, max_tile_rows] and never (much) exceed rows.
    """
    t = max(min_tile_rows, min(max_tile_rows, pl.cdiv(rows, target_steps)))
    t = _round_up(t, 16)
    t = min(t, _round_up(rows, 16))
    return max(t, 8)


def add_layernorm(x_a, x_b, gamma, beta, *, max_tile_rows=512):
    assert x_a.shape == x_b.shape
    *lead, H = x_a.shape
    assert H == HIDDEN
    rows = 1
    for d in lead:
        rows *= d

    a2 = x_a.reshape(rows, H)
    b2 = x_b.reshape(rows, H)
    g2 = gamma.reshape(1, H).astype(jnp.float32)
    be2 = beta.reshape(1, H).astype(jnp.float32)

    tile_rows = _pick_tile_rows(rows, max_tile_rows=max_tile_rows)
    # Partial boundary block (if any): OOB reads are per-row garbage that never
    # contaminates valid rows; OOB output rows are masked on writeback.
    grid = (pl.cdiv(rows, tile_rows),)

    # VMEM budget: double-buffered I/O blocks in the caller's dtype plus the
    # f32 temporaries the kernel body materializes (x, xc, headroom).
    elt = jnp.dtype(x_a.dtype).itemsize
    io_bytes = 2 * 3 * tile_rows * H * elt      # 2 bufs x (2 inputs + 1 output)
    tmp_bytes = 4 * tile_rows * H * 4           # f32 body temps + headroom
    vmem_limit = int(min(48 * 1024 * 1024,
                         max(32 * 1024 * 1024, io_bytes + tmp_bytes)))

    out = pl.pallas_call(
        add_layernorm_kernel,
        out_shape=jax.ShapeDtypeStruct((rows, H), x_a.dtype),
        grid_spec=pl.GridSpec(
            grid=grid,
            in_specs=[
                pl.BlockSpec((tile_rows, H), lambda i: (i, 0)),
                pl.BlockSpec((tile_rows, H), lambda i: (i, 0)),
                pl.BlockSpec((1, H), lambda i: (0, 0)),
                pl.BlockSpec((1, H), lambda i: (0, 0)),
            ],
            out_specs=pl.BlockSpec((tile_rows, H), lambda i: (i, 0)),
        ),
        compiler_params=pltpu.CompilerParams(
            dimension_semantics=("parallel",),
            vmem_limit_bytes=vmem_limit,
        ),
    )(a2, b2, g2, be2)

    return out.reshape(x_a.shape)


if __name__ == "__main__":
    key = jax.random.PRNGKey(0)
    k1, k2 = jax.random.split(key)

    # Shapes implied by the module: (1, 384, 768)
    x101 = jax.random.normal(k1, (1, 384, HIDDEN), dtype=jnp.float32)
    x98 = jax.random.normal(k2, (1, 384, HIDDEN), dtype=jnp.float32)

    # LayerNorm(768, elementwise_affine=True) default init: weight=1, bias=0
    gamma = jnp.ones((HIDDEN,), dtype=jnp.float32)
    beta = jnp.zeros((HIDDEN,), dtype=jnp.float32)

    out = add_layernorm(x101, x98, gamma, beta)
    out = jax.block_until_ready(out)

    # Reference check in plain JAX (two-pass, like torch.nn.LayerNorm)
    x = x101 + x98
    mean = jnp.mean(x, axis=-1, keepdims=True)
    var = jnp.mean((x - mean) ** 2, axis=-1, keepdims=True)
    ref = (x - mean) * lax.rsqrt(var + EPS) * gamma + beta
    assert jnp.allclose(out, ref, atol=3e-5, rtol=1e-5), "mismatch vs reference"

    print("KERNEL_OK")
</pallas_src>

<mosaic_0001>
module attributes {stable_mosaic.version = 11 : i64} {
  func.func @add_layernorm_kernel(%arg0: i32, %arg1: memref<96x768xf32, #tpu.memory_space<vmem>>, %arg2: memref<96x768xf32, #tpu.memory_space<vmem>>, %arg3: memref<1x768xf32, #tpu.memory_space<vmem>>, %arg4: memref<1x768xf32, #tpu.memory_space<vmem>>, %arg5: memref<96x768xf32, #tpu.memory_space<vmem>>) attributes {dimension_semantics = [#tpu.dimension_semantics<parallel>], iteration_bounds = array<i64: 4>, scalar_prefetch = 0 : i64, scratch_operands = 0 : i64, tpu.core_type = #tpu.core_type<tc>, window_params = [{transform_indices = @transform_0, window_bounds = array<i64: 96, 768>}, {transform_indices = @transform_1, window_bounds = array<i64: 96, 768>}, {pipeline_mode = #tpu.pipeline_mode<synchronous>, transform_indices = @transform_2, window_bounds = array<i64: 1, 768>}, {pipeline_mode = #tpu.pipeline_mode<synchronous>, transform_indices = @transform_3, window_bounds = array<i64: 1, 768>}, {transform_indices = @transform_4, window_bounds = array<i64: 96, 768>}]} {
    %c0 = arith.constant 0 : index
    %c0_0 = arith.constant 0 : index
    %0 = vector.load %arg1[%c0, %c0_0] : memref<96x768xf32, #tpu.memory_space<vmem>>, vector<96x768xf32>
    %c0_1 = arith.constant 0 : index
    %c0_2 = arith.constant 0 : index
    %1 = vector.load %arg2[%c0_1, %c0_2] : memref<96x768xf32, #tpu.memory_space<vmem>>, vector<96x768xf32>
    %2 = arith.addf %0, %1 : vector<96x768xf32>
    %cst = arith.constant dense<0.000000e+00> : vector<96xf32>
    %3 = vector.multi_reduction <add>, %2, %cst [1] : vector<96x768xf32> to vector<96xf32>
    %4 = vector.shape_cast %3 : vector<96xf32> to vector<96x1xf32>
    %cst_3 = arith.constant 0.00130208337 : f32
    %5 = vector.broadcast %cst_3 : f32 to vector<96x1xf32>
    %6 = arith.mulf %4, %5 : vector<96x1xf32>
    %7 = vector.broadcast %6 : vector<96x1xf32> to vector<96x768xf32>
    %8 = arith.subf %2, %7 : vector<96x768xf32>
    %9 = arith.mulf %8, %8 : vector<96x768xf32>
    %cst_4 = arith.constant dense<0.000000e+00> : vector<96xf32>
    %10 = vector.multi_reduction <add>, %9, %cst_4 [1] : vector<96x768xf32> to vector<96xf32>
    %11 = vector.shape_cast %10 : vector<96xf32> to vector<96x1xf32>
    %cst_5 = arith.constant 0.00130208337 : f32
    %12 = vector.broadcast %cst_5 : f32 to vector<96x1xf32>
    %13 = arith.mulf %11, %12 : vector<96x1xf32>
    %cst_6 = arith.constant 9.99999996E-13 : f32
    %14 = vector.broadcast %cst_6 : f32 to vector<96x1xf32>
    %15 = arith.addf %13, %14 : vector<96x1xf32>
    %16 = math.rsqrt %15 : vector<96x1xf32>
    %17 = vector.broadcast %16 : vector<96x1xf32> to vector<96x768xf32>
    %18 = arith.mulf %8, %17 : vector<96x768xf32>
    %c0_7 = arith.constant 0 : index
    %c0_8 = arith.constant 0 : index
    %19 = vector.load %arg3[%c0_7, %c0_8] : memref<1x768xf32, #tpu.memory_space<vmem>>, vector<1x768xf32>
    %20 = vector.broadcast %19 : vector<1x768xf32> to vector<96x768xf32>
    %21 = arith.mulf %18, %20 : vector<96x768xf32>
    %c0_9 = arith.constant 0 : index
    %c0_10 = arith.constant 0 : index
    %22 = vector.load %arg4[%c0_9, %c0_10] : memref<1x768xf32, #tpu.memory_space<vmem>>, vector<1x768xf32>
    %23 = vector.broadcast %22 : vector<1x768xf32> to vector<96x768xf32>
    %24 = arith.addf %21, %23 : vector<96x768xf32>
    %c0_11 = arith.constant 0 : index
    %c0_12 = arith.constant 0 : index
    %25 = vector.load %arg5[%c0_11, %c0_12] : memref<96x768xf32, #tpu.memory_space<vmem>>, vector<96x768xf32>
    tpu.vector_store %arg5[%c0_11, %c0_12], %24 {strides = array<i32>} : memref<96x768xf32, #tpu.memory_space<vmem>>, vector<96x768xf32>,
    return
  }
  func.func @transform_0(%arg0: i32) -> (i32, i32) {
    %c0_i32 = arith.constant 0 : i32
    %c0_i32_0 = arith.constant 0 : i32
    return %arg0, %c0_i32 : i32, i32
  }
  func.func @transform_1(%arg0: i32) -> (i32, i32) {
    %c0_i32 = arith.constant 0 : i32
    %c0_i32_0 = arith.constant 0 : i32
    return %arg0, %c0_i32 : i32, i32
  }
  func.func @transform_2(%arg0: i32) -> (i32, i32) {
    %c0_i32 = arith.constant 0 : i32
    %c0_i32_0 = arith.constant 0 : i32
    %c0_i32_1 = arith.constant 0 : i32
    return %c0_i32, %c0_i32_0 : i32, i32
  }
  func.func @transform_3(%arg0: i32) -> (i32, i32) {
    %c0_i32 = arith.constant 0 : i32
    %c0_i32_0 = arith.constant 0 : i32
    %c0_i32_1 = arith.constant 0 : i32
    return %c0_i32, %c0_i32_0 : i32, i32
  }
  func.func @transform_4(%arg0: i32) -> (i32, i32) {
    %c0_i32 = arith.constant 0 : i32
    %c0_i32_0 = arith.constant 0 : i32
    return %arg0, %c0_i32 : i32, i32
  }
}

</mosaic_0001>

<llo_original>
// kernel: tpu_custom_call.1
$region0: #{tpu_custom_call.1}
  #allocation0 [shape = 'u32[]', space=smem, size = 0x4, offset = 0x4, fixed_abs, tag = 'smem constant byte address 0x4 - core index']
  #allocation1 [shape = 'u32[144,128]{1,0:T(1,128)}', space=vmem, size = 0x12000, scoped, tag = 'internal scratch']
  %s0 = inlined_call_operand.hbm [shape: f32[384,768], index: 0, kind: input, shape index: {}]
  %s1 = inlined_call_operand.hbm [shape: f32[384,768], index: 1, kind: input, shape index: {}]
  %s2 = inlined_call_operand.hbm [shape: f32[1,768], index: 2, kind: input, shape index: {}]
  %s3 = inlined_call_operand.hbm [shape: f32[1,768], index: 3, kind: input, shape index: {}]
  %s4 = inlined_call_operand.hbm [shape: f32[384,768], index: 4, kind: output, shape index: {}]
  %s5 = sld [smem:[#allocation0]]
  $region65: #{tpu_custom_call.1} parent=0
    _
  %s7 = ssub.s32 1, %s5
  %s8 = scalar_select 0, %s7, %s5
  $region1: #{tpu_custom_call.1} parent=0
    #allocation2 [shape = 'u8[589824]{0}', space=vmem, size = 0x90000, scoped, tag = 'input window, operand 0']
    #allocation3 [shape = 's32[2]{0}', space=sflag, size = 0x8, scoped, tag = 'scoped memory for tpu_custom_call.1']
    #allocation4 [shape = 's32[2]{0}', space=sflag, size = 0x8, scoped, tag = 'scoped memory for tpu_custom_call.1']
    #allocation5 [shape = 'u8[589824]{0}', space=vmem, size = 0x90000, scoped, tag = 'input window, operand 1']
    #allocation6 [shape = 's32[2]{0}', space=sflag, size = 0x8, scoped, tag = 'scoped memory for tpu_custom_call.1']
    #allocation7 [shape = 'u8[3072]{0}', space=vmem, size = 0xc00, scoped, tag = 'input window, operand 2, single buffered']
    #allocation8 [shape = 'u8[3072]{0}', space=vmem, size = 0xc00, scoped, tag = 'input window, operand 3, single buffered']
    #allocation9 [shape = 's32[1]{0}', space=sflag, size = 0x4, scoped, tag = 'scoped memory for tpu_custom_call.1']
    #allocation10 [shape = 'u8[589824]{0}', space=vmem, size = 0x90000, scoped, tag = 'output window, operand 0']
    %9 = vsyncpa [#allocation3], 0
    %s10 = scalar_lea.sflag [#allocation3], 1
    %11 = vsyncpa %s10, 0
    %12 = vsyncpa [#allocation6], 0
    %s13 = scalar_lea.sflag [#allocation6], 1
    %14 = vsyncpa %s13, 0
    %15 = vsyncpa [#allocation9], 0
    %16 = vsyncpa [#allocation4], 0
    %s17 = scalar_lea.sflag [#allocation4], 1
    %18 = vsyncpa %s17, 0
    loop: start=0, step=1, limit=6
    $region2: #{tpu_custom_call.1} parent=1 // loop_pre_header
      _
    $region3: #{tpu_custom_call.1} parent=1 // loop_header
      %s20 = sphi 0, %s24
      %p21 = scmp.ge.s32.totalorder %s20, 6
      %s30 = sphi 0, %s32
      %s33 = sphi 0, %s30
      %s34 = sphi 0, %s33
      %s50 = sphi 0, %s34
      %s56 = sphi 0, %s58
      %s59 = sphi 0, %s56
      %s60 = sphi 0, %s59
      %s76 = sphi 0, %s60
      %s80 = sphi 0, %s80
      %s82 = sphi 0, %s80
      %s83 = sphi 0, %s82
      %s97 = sphi 0, %s83
      %s101 = sphi 0, %s101
      %s103 = sphi 0, %s101
      %s104 = sphi 0, %s103
      %s118 = sphi 0, %s104
      %s124 = sphi 0, %s126
      %s127 = sphi 0, %s124
      %s128 = sphi 0, %s127
      %s144 = sphi 0, %s128
    $region4: #{tpu_custom_call.1} parent=1 // loop_header_branch
      %23 = sbr.rel (%p21) target = $region8
    $region5: #{tpu_custom_call.1} parent=1 // loop_body
      %s25 = ssub.s32 %s20, 1
      %s26 = ssub.s32 %s20, 2
      %s27 = sadd.s32 %s20, 1
      %s28 = ssub.s32 %s20, %s27
      %p29 = scmp.eq.s32.totalorder %s28, 0
      %s31 = sadd.s32 %s30, 1
      %s32 = scalar_select %p29, %s30, %s31
      %p35 = pneg %p29
      %p36 = scmp.eq.s32.totalorder %s20, 3
      %p37 = por %p35, %p36
      %p38 = scmp.ne.s32.totalorder %s30, %s33
      %p39 = scmp.eq.s32.totalorder %s20, 0
      %p40 = por %p38, %p39
      %p41 = scmp.ne.s32.totalorder %s30, %s33
      %p42 = scmp.eq.s32.totalorder %s25, 3
      %p43 = por %p41, %p42
      %p44 = scmp.ne.s32.totalorder %s33, %s34
      %p45 = scmp.eq.s32.totalorder %s25, 0
      %p46 = por %p44, %p45
      %p47 = scmp.ne.s32.totalorder %s33, %s34
      %p48 = scmp.eq.s32.totalorder %s26, 3
      %p49 = por %p47, %p48
      %p51 = scmp.ne.s32.totalorder %s34, %s50
      %p52 = scmp.eq.s32.totalorder %s26, 0
      %p53 = por %p51, %p52
      %s54 = ssub.s32 %s20, %s27
      %p55 = scmp.eq.s32.totalorder %s54, 0
      %s57 = sadd.s32 %s56, 1
      %s58 = scalar_select %p55, %s56, %s57
      %p61 = pneg %p55
      %p62 = scmp.eq.s32.totalorder %s20, 3
      %p63 = por %p61, %p62
      %p64 = scmp.ne.s32.totalorder %s56, %s59
      %p65 = scmp.eq.s32.totalorder %s20, 0
      %p66 = por %p64, %p65
      %p67 = scmp.ne.s32.totalorder %s56, %s59
      %p68 = scmp.eq.s32.totalorder %s25, 3
      %p69 = por %p67, %p68
      %p70 = scmp.ne.s32.totalorder %s59, %s60
      %p71 = scmp.eq.s32.totalorder %s25, 0
      %p72 = por %p70, %p71
      %p73 = scmp.ne.s32.totalorder %s59, %s60
      %p74 = scmp.eq.s32.totalorder %s26, 3
      %p75 = por %p73, %p74
      %p77 = scmp.ne.s32.totalorder %s60, %s76
      %p78 = scmp.eq.s32.totalorder %s26, 0
      %p79 = por %p77, %p78
      %s81 = sadd.s32 %s80, 1
      %p84 = scmp.eq.s32.totalorder %s20, 3
      %p85 = scmp.ne.s32.totalorder %s80, %s82
      %p86 = scmp.eq.s32.totalorder %s20, 0
      %p87 = por %p85, %p86
      %p88 = scmp.ne.s32.totalorder %s80, %s82
      %p89 = scmp.eq.s32.totalorder %s25, 3
      %p90 = por %p88, %p89
      %p91 = scmp.ne.s32.totalorder %s82, %s83
      %p92 = scmp.eq.s32.totalorder %s25, 0
      %p93 = por %p91, %p92
      %p94 = scmp.ne.s32.totalorder %s82, %s83
      %p95 = scmp.eq.s32.totalorder %s26, 3
      %p96 = por %p94, %p95
      %p98 = scmp.ne.s32.totalorder %s83, %s97
      %p99 = scmp.eq.s32.totalorder %s26, 0
      %p100 = por %p98, %p99
      %s102 = sadd.s32 %s101, 1
      %p105 = scmp.eq.s32.totalorder %s20, 3
      %p106 = scmp.ne.s32.totalorder %s101, %s103
      %p107 = scmp.eq.s32.totalorder %s20, 0
      %p108 = por %p106, %p107
      %p109 = scmp.ne.s32.totalorder %s101, %s103
      %p110 = scmp.eq.s32.totalorder %s25, 3
      %p111 = por %p109, %p110
      %p112 = scmp.ne.s32.totalorder %s103, %s104
      %p113 = scmp.eq.s32.totalorder %s25, 0
      %p114 = por %p112, %p113
      %p115 = scmp.ne.s32.totalorder %s103, %s104
      %p116 = scmp.eq.s32.totalorder %s26, 3
      %p117 = por %p115, %p116
      %p119 = scmp.ne.s32.totalorder %s104, %s118
      %p120 = scmp.eq.s32.totalorder %s26, 0
      %p121 = por %p119, %p120
      %s122 = ssub.s32 %s20, %s27
      %p123 = scmp.eq.s32.totalorder %s122, 0
      %s125 = sadd.s32 %s124, 1
      %s126 = scalar_select %p123, %s124, %s125
      %p129 = pneg %p123
      %p130 = scmp.eq.s32.totalorder %s20, 3
      %p131 = por %p129, %p130
      %p132 = scmp.ne.s32.totalorder %s124, %s127
      %p133 = scmp.eq.s32.totalorder %s20, 0
      %p134 = por %p132, %p133
      %p135 = scmp.ne.s32.totalorder %s124, %s127
      %p136 = scmp.eq.s32.totalorder %s25, 3
      %p137 = por %p135, %p136
      %p138 = scmp.ne.s32.totalorder %s127, %s128
      %p139 = scmp.eq.s32.totalorder %s25, 0
      %p140 = por %p138, %p139
      %p141 = scmp.ne.s32.totalorder %s127, %s128
      %p142 = scmp.eq.s32.totalorder %s26, 3
      %p143 = por %p141, %p142
      %p145 = scmp.ne.s32.totalorder %s128, %s144
      %p146 = scmp.eq.s32.totalorder %s26, 0
      %p147 = por %p145, %p146
      %p148 = scmp.le.s32.totalorder 1, %s20
      %p149 = scmp.lt.s32.totalorder %s20, 5
      %p150 = pnand %p148, %p149
      %p151 = pneg %p150
      // Predicated region
      $region9: #{tpu_custom_call.1} parent=5 // pred_check
        _
      $region10: #{tpu_custom_call.1} parent=5 // pred_check_branch
        %153 = sbr.rel (%p150) target = $region12
      $region11: #{tpu_custom_call.1} parent=5 // pred_region
        %s154 = ssub.s32 %s20, 1
        // Predicated region
        $region13: #{tpu_custom_call.1} parent=11 // pred_check
          %p155 = pneg %p93
        $region14: #{tpu_custom_call.1} parent=11 // pred_check_branch
          %157 = sbr.rel (%p155) target = $region16
        $region15: #{tpu_custom_call.1} parent=11 // pred_region
          %s159 = ssub.s32 96, 96
          %160 = vsyncadd [#allocation6], %s159
          %s162 = sshll.u32 [#allocation7], 4
          %s163 = int_to_ptr.vmem [resolvable:$true] %s162
          %165 = dma.hbm_to_vmem [thread:$0]  %s2, 96, %s163, [#allocation6]
        $region16: #{tpu_custom_call.1} parent=11 // pred_fallthru
          _
        // Predicated region
        $region17: #{tpu_custom_call.1} parent=11 // pred_check
          %p166 = pneg %p114
        $region18: #{tpu_custom_call.1} parent=11 // pred_check_branch
          %168 = sbr.rel (%p166) target = $region20
        $region19: #{tpu_custom_call.1} parent=11 // pred_region
          %s170 = ssub.s32 96, 96
          %171 = vsyncadd [#allocation9], %s170
          %s173 = sshll.u32 [#allocation8], 4
          %s174 = int_to_ptr.vmem [resolvable:$true] %s173
          %176 = dma.hbm_to_vmem [thread:$0]  %s3, 96, %s174, [#allocation9]
        $region20: #{tpu_custom_call.1} parent=11 // pred_fallthru
          _
      $region12: #{tpu_custom_call.1} parent=5 // pred_fallthru
        _
      %p177 = scmp.lt.s32.totalorder %s20, 4
      // Predicated region
      $region21: #{tpu_custom_call.1} parent=5 // pred_check
        %p178 = pneg %p177
      $region22: #{tpu_custom_call.1} parent=5 // pred_check_branch
        %180 = sbr.rel (%p178) target = $region24
      $region23: #{tpu_custom_call.1} parent=5 // pred_region
        // Predicated region
        $region25: #{tpu_custom_call.1} parent=23 // pred_check
          %p181 = pneg %p40
        $region26: #{tpu_custom_call.1} parent=23 // pred_check_branch
          %183 = sbr.rel (%p181) target = $region28
        $region27: #{tpu_custom_call.1} parent=23 // pred_region
          %s184 = sand.u32 %s30, 1
          %s185 = scalar_lea.sflag [#allocation3], %s184
          %s186 = sand.u32 %s30, 1
          %s187 = smul.addr %s186, 576
          %s188 = scalar_lea.vmem [#allocation2], %s187
          %s189 = smul.u32 12, %s20
          %s191 = ssub.s32 9216, 9216
          %192 = vsyncadd %s185, %s191
          %s193 = smul.addr %s189, 6
          %s194 = smul.addr %s193, 128
          %s195 = scalar_lea.hbm %s0, %s194
          %s196 = sshll.u32 %s188, 4
          %s197 = int_to_ptr.vmem [resolvable:$true] %s196
          %202 = dma.hbm_to_vmem [thread:$0]  %s195, 9216, %s197, %s185, 768, 768, 48
        $region28: #{tpu_custom_call.1} parent=23 // pred_fallthru
          _
        // Predicated region
        $region29: #{tpu_custom_call.1} parent=23 // pred_check
          %p203 = pneg %p66
        $region30: #{tpu_custom_call.1} parent=23 // pred_check_branch
          %205 = sbr.rel (%p203) target = $region32
        $region31: #{tpu_custom_call.1} parent=23 // pred_region
          %s206 = sand.u32 %s20, 1
          %s207 = scalar_lea.sflag [#allocation6], %s206
          %s208 = sand.u32 %s56, 1
          %s209 = smul.addr %s208, 576
          %s210 = scalar_lea.vmem [#allocation5], %s209
          %s211 = smul.u32 12, %s20
          %s213 = ssub.s32 9216, 9216
          %214 = vsyncadd %s207, %s213
          %s215 = smul.addr %s211, 6
          %s216 = smul.addr %s215, 128
          %s217 = scalar_lea.hbm %s1, %s216
          %s218 = sshll.u32 %s210, 4
          %s219 = int_to_ptr.vmem [resolvable:$true] %s218
          %224 = dma.hbm_to_vmem [thread:$0]  %s217, 9216, %s219, %s207, 768, 768, 48
        $region32: #{tpu_custom_call.1} parent=23 // pred_fallthru
          _
      $region24: #{tpu_custom_call.1} parent=5 // pred_fallthru
        _
      %p225 = scmp.le.s32.totalorder 1, %s20
      %p226 = scmp.lt.s32.totalorder %s20, 5
      %p227 = pnand %p225, %p226
      %p228 = pneg %p227
      // Predicated region
      $region33: #{tpu_custom_call.1} parent=5 // pred_check
        _
      $region34: #{tpu_custom_call.1} parent=5 // pred_check_branch
        %230 = sbr.rel (%p227) target = $region36
      $region35: #{tpu_custom_call.1} parent=5 // pred_region
        %s231 = ssub.s32 %s20, 1
        %s232 = sand.u32 %s33, 1
        %s233 = scalar_lea.sflag [#allocation3], %s232
        %s234 = sand.u32 %s33, 1
        %s235 = smul.addr %s234, 576
        %s236 = scalar_lea.vmem [#allocation2], %s235
        // Predicated region
        $region37: #{tpu_custom_call.1} parent=35 // pred_check
          %p237 = pneg %p46
        $region38: #{tpu_custom_call.1} parent=35 // pred_check_branch
          %239 = sbr.rel (%p237) target = $region40
        $region39: #{tpu_custom_call.1} parent=35 // pred_region
          %240 = dma.done %s233, 9216
        $region40: #{tpu_custom_call.1} parent=35 // pred_fallthru
          _
        %s241 = sand.u32 %s25, 1
        %s242 = scalar_lea.sflag [#allocation6], %s241
        %s243 = sand.u32 %s59, 1
        %s244 = smul.addr %s243, 576
        %s245 = scalar_lea.vmem [#allocation5], %s244
        // Predicated region
        $region41: #{tpu_custom_call.1} parent=35 // pred_check
          %p246 = pneg %p72
        $region42: #{tpu_custom_call.1} parent=35 // pred_check_branch
          %248 = sbr.rel (%p246) target = $region44
        $region43: #{tpu_custom_call.1} parent=35 // pred_region
          %249 = dma.done %s242, 9216
        $region44: #{tpu_custom_call.1} parent=35 // pred_fallthru
          _
        // Predicated region
        $region45: #{tpu_custom_call.1} parent=35 // pred_check
          %p250 = pneg %p93
        $region46: #{tpu_custom_call.1} parent=35 // pred_check_branch
          %252 = sbr.rel (%p250) target = $region48
        $region47: #{tpu_custom_call.1} parent=35 // pred_region
          %253 = dma.done [#allocation6], 96
        $region48: #{tpu_custom_call.1} parent=35 // pred_fallthru
          _
        // Predicated region
        $region49: #{tpu_custom_call.1} parent=35 // pred_check
          %p254 = pneg %p114
        $region50: #{tpu_custom_call.1} parent=35 // pred_check_branch
          %256 = sbr.rel (%p254) target = $region52
        $region51: #{tpu_custom_call.1} parent=35 // pred_region
          %257 = dma.done [#allocation9], 96
        $region52: #{tpu_custom_call.1} parent=35 // pred_fallthru
          _
        %s258 = sand.u32 %s33, 1
        %s259 = scalar_lea.sflag [#allocation3], %s258
        %s260 = sand.u32 %s33, 1
        %s261 = smul.addr %s260, 576
        %s262 = scalar_lea.vmem [#allocation2], %s261
        %p263 = pneg %p46
        %p264 = pneg %p43
        %s265 = sand.u32 %s25, 1
        %s266 = scalar_lea.sflag [#allocation6], %s265
        %s267 = sand.u32 %s59, 1
        %s268 = smul.addr %s267, 576
        %s269 = scalar_lea.vmem [#allocation5], %s268
        %p270 = pneg %p72
        %p271 = pneg %p69
        %p272 = pneg %p93
        %p273 = pneg %p90
        %p274 = pneg %p114
        %p275 = pneg %p111
        %p276 = pneg %p140
        %p277 = pneg %p137
        %s278 = sand.u32 %s127, 1
        %s279 = scalar_lea.sflag [#allocation4], %s278
        %s280 = sand.u32 %s127, 1
        %s281 = smul.addr %s280, 576
        %s282 = scalar_lea.vmem [#allocation10], %s281
        %s283 = smul.u32 12, %s25
        %s284 = smul.u32 12, %s25
        %s285 = smul.u32 12, %s25
        %v286 = vld [vmem:[%s236] sm:$0xff]
        %v287 = vld [vmem:[%s236 + $0x8] sm:$0xff]
        %v288 = vld [vmem:[%s236 + $0x10] sm:$0xff]
        %v289 = vld [vmem:[%s236 + $0x18] sm:$0xff]
        %v290 = vld [vmem:[%s236 + $0x20] sm:$0xff]
        %v291 = vld [vmem:[%s236 + $0x28] sm:$0xff]
        %v292 = vld [vmem:[%s236 + $0x30] sm:$0xff]
        %v293 = vld [vmem:[%s236 + $0x38] sm:$0xff]
        %v294 = vld [vmem:[%s236 + $0x40] sm:$0xff]
        %v295 = vld [vmem:[%s236 + $0x48] sm:$0xff]
        %v296 = vld [vmem:[%s236 + $0x50] sm:$0xff]
        %v297 = vld [vmem:[%s236 + $0x58] sm:$0xff]
        %v298 = vld [vmem:[%s236 + $0x60] sm:$0xff]
        %v299 = vld [vmem:[%s236 + $0x68] sm:$0xff]
        %v300 = vld [vmem:[%s236 + $0x70] sm:$0xff]
        %v301 = vld [vmem:[%s236 + $0x78] sm:$0xff]
        %v302 = vld [vmem:[%s236 + $0x80] sm:$0xff]
        %v303 = vld [vmem:[%s236 + $0x88] sm:$0xff]
        %v304 = vld [vmem:[%s236 + $0x90] sm:$0xff]
        %v305 = vld [vmem:[%s236 + $0x98] sm:$0xff]
        %v306 = vld [vmem:[%s236 + $0xa0] sm:$0xff]
        %v307 = vld [vmem:[%s236 + $0xa8] sm:$0xff]
        %v308 = vld [vmem:[%s236 + $0xb0] sm:$0xff]
        %v309 = vld [vmem:[%s236 + $0xb8] sm:$0xff]
        %v310 = vld [vmem:[%s236 + $0xc0] sm:$0xff]
        %v311 = vld [vmem:[%s236 + $0xc8] sm:$0xff]
        %v312 = vld [vmem:[%s236 + $0xd0] sm:$0xff]
        %v313 = vld [vmem:[%s236 + $0xd8] sm:$0xff]
        %v314 = vld [vmem:[%s236 + $0xe0] sm:$0xff]
        %v315 = vld [vmem:[%s236 + $0xe8] sm:$0xff]
        %v316 = vld [vmem:[%s236 + $0xf0] sm:$0xff]
        %v317 = vld [vmem:[%s236 + $0xf8] sm:$0xff]
        %v318 = vld [vmem:[%s236 + $0x100] sm:$0xff]
        %v319 = vld [vmem:[%s236 + $0x108] sm:$0xff]
        %v320 = vld [vmem:[%s236 + $0x110] sm:$0xff]
        %v321 = vld [vmem:[%s236 + $0x118] sm:$0xff]
        %v322 = vld [vmem:[%s236 + $0x120] sm:$0xff]
        %v323 = vld [vmem:[%s236 + $0x128] sm:$0xff]
        %v324 = vld [vmem:[%s236 + $0x130] sm:$0xff]
        %v325 = vld [vmem:[%s236 + $0x138] sm:$0xff]
        %v326 = vld [vmem:[%s236 + $0x140] sm:$0xff]
        %v327 = vld [vmem:[%s236 + $0x148] sm:$0xff]
        %v328 = vld [vmem:[%s236 + $0x150] sm:$0xff]
        %v329 = vld [vmem:[%s236 + $0x158] sm:$0xff]
        %v330 = vld [vmem:[%s236 + $0x160] sm:$0xff]
        %v331 = vld [vmem:[%s236 + $0x168] sm:$0xff]
        %v332 = vld [vmem:[%s236 + $0x170] sm:$0xff]
        %v333 = vld [vmem:[%s236 + $0x178] sm:$0xff]
        %v334 = vld [vmem:[%s236 + $0x180] sm:$0xff]
        %v335 = vld [vmem:[%s236 + $0x188] sm:$0xff]
        %v336 = vld [vmem:[%s236 + $0x190] sm:$0xff]
        %v337 = vld [vmem:[%s236 + $0x198] sm:$0xff]
        %v338 = vld [vmem:[%s236 + $0x1a0] sm:$0xff]
        %v339 = vld [vmem:[%s236 + $0x1a8] sm:$0xff]
        %v340 = vld [vmem:[%s236 + $0x1b0] sm:$0xff]
        %v341 = vld [vmem:[%s236 + $0x1b8] sm:$0xff]
        %v342 = vld [vmem:[%s236 + $0x1c0] sm:$0xff]
        %v343 = vld [vmem:[%s236 + $0x1c8] sm:$0xff]
        %v344 = vld [vmem:[%s236 + $0x1d0] sm:$0xff]
        %v345 = vld [vmem:[%s236 + $0x1d8] sm:$0xff]
        %v346 = vld [vmem:[%s236 + $0x1e0] sm:$0xff]
        %v347 = vld [vmem:[%s236 + $0x1e8] sm:$0xff]
        %v348 = vld [vmem:[%s236 + $0x1f0] sm:$0xff]
        %v349 = vld [vmem:[%s236 + $0x1f8] sm:$0xff]
        %v350 = vld [vmem:[%s236 + $0x200] sm:$0xff]
        %v351 = vld [vmem:[%s236 + $0x208] sm:$0xff]
        %v352 = vld [vmem:[%s236 + $0x210] sm:$0xff]
        %v353 = vld [vmem:[%s236 + $0x218] sm:$0xff]
        %v354 = vld [vmem:[%s236 + $0x220] sm:$0xff]
        %v355 = vld [vmem:[%s236 + $0x228] sm:$0xff]
        %v356 = vld [vmem:[%s236 + $0x230] sm:$0xff]
        %v357 = vld [vmem:[%s236 + $0x238] sm:$0xff]
        %v358 = vld [vmem:[%s245] sm:$0xff]
        %v359 = vld [vmem:[%s245 + $0x8] sm:$0xff]
        %v360 = vld [vmem:[%s245 + $0x10] sm:$0xff]
        %v361 = vld [vmem:[%s245 + $0x18] sm:$0xff]
        %v362 = vld [vmem:[%s245 + $0x20] sm:$0xff]
        %v363 = vld [vmem:[%s245 + $0x28] sm:$0xff]
        %v364 = vld [vmem:[%s245 + $0x30] sm:$0xff]
        %v365 = vld [vmem:[%s245 + $0x38] sm:$0xff]
        %v366 = vld [vmem:[%s245 + $0x40] sm:$0xff]
        %v367 = vld [vmem:[%s245 + $0x48] sm:$0xff]
        %v368 = vld [vmem:[%s245 + $0x50] sm:$0xff]
        %v369 = vld [vmem:[%s245 + $0x58] sm:$0xff]
        %v370 = vld [vmem:[%s245 + $0x60] sm:$0xff]
        %v371 = vld [vmem:[%s245 + $0x68] sm:$0xff]
        %v372 = vld [vmem:[%s245 + $0x70] sm:$0xff]
        %v373 = vld [vmem:[%s245 + $0x78] sm:$0xff]
        %v374 = vld [vmem:[%s245 + $0x80] sm:$0xff]
        %v375 = vld [vmem:[%s245 + $0x88] sm:$0xff]
        %v376 = vld [vmem:[%s245 + $0x90] sm:$0xff]
        %v377 = vld [vmem:[%s245 + $0x98] sm:$0xff]
        %v378 = vld [vmem:[%s245 + $0xa0] sm:$0xff]
        %v379 = vld [vmem:[%s245 + $0xa8] sm:$0xff]
        %v380 = vld [vmem:[%s245 + $0xb0] sm:$0xff]
        %v381 = vld [vmem:[%s245 + $0xb8] sm:$0xff]
        %v382 = vld [vmem:[%s245 + $0xc0] sm:$0xff]
        %v383 = vld [vmem:[%s245 + $0xc8] sm:$0xff]
        %v384 = vld [vmem:[%s245 + $0xd0] sm:$0xff]
        %v385 = vld [vmem:[%s245 + $0xd8] sm:$0xff]
        %v386 = vld [vmem:[%s245 + $0xe0] sm:$0xff]
        %v387 = vld [vmem:[%s245 + $0xe8] sm:$0xff]
        %v388 = vld [vmem:[%s245 + $0xf0] sm:$0xff]
        %v389 = vld [vmem:[%s245 + $0xf8] sm:$0xff]
        %v390 = vld [vmem:[%s245 + $0x100] sm:$0xff]
        %v391 = vld [vmem:[%s245 + $0x108] sm:$0xff]
        %v392 = vld [vmem:[%s245 + $0x110] sm:$0xff]
        %v393 = vld [vmem:[%s245 + $0x118] sm:$0xff]
        %v394 = vld [vmem:[%s245 + $0x120] sm:$0xff]
        %v395 = vld [vmem:[%s245 + $0x128] sm:$0xff]
        %v396 = vld [vmem:[%s245 + $0x130] sm:$0xff]
        %v397 = vld [vmem:[%s245 + $0x138] sm:$0xff]
        %v398 = vld [vmem:[%s245 + $0x140] sm:$0xff]
        %v399 = vld [vmem:[%s245 + $0x148] sm:$0xff]
        %v400 = vld [vmem:[%s245 + $0x150] sm:$0xff]
        %v401 = vld [vmem:[%s245 + $0x158] sm:$0xff]
        %v402 = vld [vmem:[%s245 + $0x160] sm:$0xff]
        %v403 = vld [vmem:[%s245 + $0x168] sm:$0xff]
        %v404 = vld [vmem:[%s245 + $0x170] sm:$0xff]
        %v405 = vld [vmem:[%s245 + $0x178] sm:$0xff]
        %v406 = vld [vmem:[%s245 + $0x180] sm:$0xff]
        %v407 = vld [vmem:[%s245 + $0x188] sm:$0xff]
        %v408 = vld [vmem:[%s245 + $0x190] sm:$0xff]
        %v409 = vld [vmem:[%s245 + $0x198] sm:$0xff]
        %v410 = vld [vmem:[%s245 + $0x1a0] sm:$0xff]
        %v411 = vld [vmem:[%s245 + $0x1a8] sm:$0xff]
        %v412 = vld [vmem:[%s245 + $0x1b0] sm:$0xff]
        %v413 = vld [vmem:[%s245 + $0x1b8] sm:$0xff]
        %v414 = vld [vmem:[%s245 + $0x1c0] sm:$0xff]
        %v415 = vld [vmem:[%s245 + $0x1c8] sm:$0xff]
        %v416 = vld [vmem:[%s245 + $0x1d0] sm:$0xff]
        %v417 = vld [vmem:[%s245 + $0x1d8] sm:$0xff]
        %v418 = vld [vmem:[%s245 + $0x1e0] sm:$0xff]
        %v419 = vld [vmem:[%s245 + $0x1e8] sm:$0xff]
        %v420 = vld [vmem:[%s245 + $0x1f0] sm:$0xff]
        %v421 = vld [vmem:[%s245 + $0x1f8] sm:$0xff]
        %v422 = vld [vmem:[%s245 + $0x200] sm:$0xff]
        %v423 = vld [vmem:[%s245 + $0x208] sm:$0xff]
        %v424 = vld [vmem:[%s245 + $0x210] sm:$0xff]
        %v425 = vld [vmem:[%s245 + $0x218] sm:$0xff]
        %v426 = vld [vmem:[%s245 + $0x220] sm:$0xff]
        %v427 = vld [vmem:[%s245 + $0x228] sm:$0xff]
        %v428 = vld [vmem:[%s245 + $0x230] sm:$0xff]
        %v429 = vld [vmem:[%s245 + $0x238] sm:$0xff]
        %v430 = vadd.f32 %v286, %v358
        %v431 = vadd.f32 %v287, %v359
        %v432 = vadd.f32 %v288, %v360
        %v433 = vadd.f32 %v289, %v361
        %v434 = vadd.f32 %v290, %v362
        %v435 = vadd.f32 %v291, %v363
        %v436 = vadd.f32 %v292, %v364
        %v437 = vadd.f32 %v293, %v365
        %v438 = vadd.f32 %v294, %v366
        %v439 = vadd.f32 %v295, %v367
        %v440 = vadd.f32 %v296, %v368
        %v441 = vadd.f32 %v297, %v369
        %v442 = vadd.f32 %v298, %v370
        %v443 = vadd.f32 %v299, %v371
        %v444 = vadd.f32 %v300, %v372
        %v445 = vadd.f32 %v301, %v373
        %v446 = vadd.f32 %v302, %v374
        %v447 = vadd.f32 %v303, %v375
        %v448 = vadd.f32 %v304, %v376
        %v449 = vadd.f32 %v305, %v377
        %v450 = vadd.f32 %v306, %v378
        %v451 = vadd.f32 %v307, %v379
        %v452 = vadd.f32 %v308, %v380
        %v453 = vadd.f32 %v309, %v381
        %v454 = vadd.f32 %v310, %v382
        %v455 = vadd.f32 %v311, %v383
        %v456 = vadd.f32 %v312, %v384
        %v457 = vadd.f32 %v313, %v385
        %v458 = vadd.f32 %v314, %v386
        %v459 = vadd.f32 %v315, %v387
        %v460 = vadd.f32 %v316, %v388
        %v461 = vadd.f32 %v317, %v389
        %v462 = vadd.f32 %v318, %v390
        %v463 = vadd.f32 %v319, %v391
        %v464 = vadd.f32 %v320, %v392
        %v465 = vadd.f32 %v321, %v393
        %v466 = vadd.f32 %v322, %v394
        %v467 = vadd.f32 %v323, %v395
        %v468 = vadd.f32 %v324, %v396
        %v469 = vadd.f32 %v325, %v397
        %v470 = vadd.f32 %v326, %v398
        %v471 = vadd.f32 %v327, %v399
        %v472 = vadd.f32 %v328, %v400
        %v473 = vadd.f32 %v329, %v401
        %v474 = vadd.f32 %v330, %v402
        %v475 = vadd.f32 %v331, %v403
        %v476 = vadd.f32 %v332, %v404
        %v477 = vadd.f32 %v333, %v405
        %v478 = vadd.f32 %v334, %v406
        %v479 = vadd.f32 %v335, %v407
        %v480 = vadd.f32 %v336, %v408
        %v481 = vadd.f32 %v337, %v409
        %v482 = vadd.f32 %v338, %v410
        %v483 = vadd.f32 %v339, %v411
        %v484 = vadd.f32 %v340, %v412
        %v485 = vadd.f32 %v341, %v413
        %v486 = vadd.f32 %v342, %v414
        %v487 = vadd.f32 %v343, %v415
        %v488 = vadd.f32 %v344, %v416
        %v489 = vadd.f32 %v345, %v417
        %v490 = vadd.f32 %v346, %v418
        %v491 = vadd.f32 %v347, %v419
        %v492 = vadd.f32 %v348, %v420
        %v493 = vadd.f32 %v349, %v421
        %v494 = vadd.f32 %v350, %v422
        %v495 = vadd.f32 %v351, %v423
        %v496 = vadd.f32 %v352, %v424
        %v497 = vadd.f32 %v353, %v425
        %v498 = vadd.f32 %v354, %v426
        %v499 = vadd.f32 %v355, %v427
        %v500 = vadd.f32 %v356, %v428
        %v501 = vadd.f32 %v357, %v429
        %v502 = vadd.f32 %v430, %v431
        %v503 = vadd.f32 %v502, %v432
        %v504 = vadd.f32 %v503, %v433
        %v505 = vadd.f32 %v504, %v434
        %v506 = vadd.f32 %v505, %v435
        %507 = vadd.xlane.f32.xlu0 %v506
        %v508 = vpop.xlane.xlu0 %507
        %v509 = vadd.f32 %v436, %v437
        %v510 = vadd.f32 %v509, %v438
        %v511 = vadd.f32 %v510, %v439
        %v512 = vadd.f32 %v511, %v440
        %v513 = vadd.f32 %v512, %v441
        %514 = vadd.xlane.f32.xlu0 %v513
        %v515 = vpop.xlane.xlu0 %514
        %v516 = vadd.f32 %v442, %v443
        %v517 = vadd.f32 %v516, %v444
        %v518 = vadd.f32 %v517, %v445
        %v519 = vadd.f32 %v518, %v446
        %v520 = vadd.f32 %v519, %v447
        %521 = vadd.xlane.f32.xlu0 %v520
        %v522 = vpop.xlane.xlu0 %521
        %v523 = vadd.f32 %v448, %v449
        %v524 = vadd.f32 %v523, %v450
        %v525 = vadd.f32 %v524, %v451
        %v526 = vadd.f32 %v525, %v452
        %v527 = vadd.f32 %v526, %v453
        %528 = vadd.xlane.f32.xlu0 %v527
        %v529 = vpop.xlane.xlu0 %528
        %v530 = vadd.f32 %v454, %v455
        %v531 = vadd.f32 %v530, %v456
        %v532 = vadd.f32 %v531, %v457
        %v533 = vadd.f32 %v532, %v458
        %v534 = vadd.f32 %v533, %v459
        %535 = vadd.xlane.f32.xlu0 %v534
        %v536 = vpop.xlane.xlu0 %535
        %v537 = vadd.f32 %v460, %v461
        %v538 = vadd.f32 %v537, %v462
        %v539 = vadd.f32 %v538, %v463
        %v540 = vadd.f32 %v539, %v464
        %v541 = vadd.f32 %v540, %v465
        %542 = vadd.xlane.f32.xlu0 %v541
        %v543 = vpop.xlane.xlu0 %542
        %v544 = vadd.f32 %v466, %v467
        %v545 = vadd.f32 %v544, %v468
        %v546 = vadd.f32 %v545, %v469
        %v547 = vadd.f32 %v546, %v470
        %v548 = vadd.f32 %v547, %v471
        %549 = vadd.xlane.f32.xlu0 %v548
        %v550 = vpop.xlane.xlu0 %549
        %v551 = vadd.f32 %v472, %v473
        %v552 = vadd.f32 %v551, %v474
        %v553 = vadd.f32 %v552, %v475
        %v554 = vadd.f32 %v553, %v476
        %v555 = vadd.f32 %v554, %v477
        %556 = vadd.xlane.f32.xlu0 %v555
        %v557 = vpop.xlane.xlu0 %556
        %v558 = vadd.f32 %v478, %v479
        %v559 = vadd.f32 %v558, %v480
        %v560 = vadd.f32 %v559, %v481
        %v561 = vadd.f32 %v560, %v482
        %v562 = vadd.f32 %v561, %v483
        %563 = vadd.xlane.f32.xlu0 %v562
        %v564 = vpop.xlane.xlu0 %563
        %v565 = vadd.f32 %v484, %v485
        %v566 = vadd.f32 %v565, %v486
        %v567 = vadd.f32 %v566, %v487
        %v568 = vadd.f32 %v567, %v488
        %v569 = vadd.f32 %v568, %v489
        %570 = vadd.xlane.f32.xlu0 %v569
        %v571 = vpop.xlane.xlu0 %570
        %v572 = vadd.f32 %v490, %v491
        %v573 = vadd.f32 %v572, %v492
        %v574 = vadd.f32 %v573, %v493
        %v575 = vadd.f32 %v574, %v494
        %v576 = vadd.f32 %v575, %v495
        %577 = vadd.xlane.f32.xlu0 %v576
        %v578 = vpop.xlane.xlu0 %577
        %v579 = vadd.f32 %v496, %v497
        %v580 = vadd.f32 %v579, %v498
        %v581 = vadd.f32 %v580, %v499
        %v582 = vadd.f32 %v581, %v500
        %v583 = vadd.f32 %v582, %v501
        %584 = vadd.xlane.f32.xlu0 %v583
        %v585 = vpop.xlane.xlu0 %584
        %v586 = vmul.f32 %v508, 0.0013020834
        %v587 = vmul.f32 %v515, 0.0013020834
        %v588 = vmul.f32 %v522, 0.0013020834
        %v589 = vmul.f32 %v529, 0.0013020834
        %v590 = vmul.f32 %v536, 0.0013020834
        %v591 = vmul.f32 %v543, 0.0013020834
        %v592 = vmul.f32 %v550, 0.0013020834
        %v593 = vmul.f32 %v557, 0.0013020834
        %v594 = vmul.f32 %v564, 0.0013020834
        %v595 = vmul.f32 %v571, 0.0013020834
        %v596 = vmul.f32 %v578, 0.0013020834
        %v597 = vmul.f32 %v585, 0.0013020834
        %v598 = vsub.f32 %v430, %v586
        %v599 = vsub.f32 %v431, %v586
        %v600 = vsub.f32 %v432, %v586
        %v601 = vsub.f32 %v433, %v586
        %v602 = vsub.f32 %v434, %v586
        %v603 = vsub.f32 %v435, %v586
        %v604 = vsub.f32 %v436, %v587
        %v605 = vsub.f32 %v437, %v587
        %v606 = vsub.f32 %v438, %v587
        %v607 = vsub.f32 %v439, %v587
        %v608 = vsub.f32 %v440, %v587
        %v609 = vsub.f32 %v441, %v587
        %v610 = vsub.f32 %v442, %v588
        %v611 = vsub.f32 %v443, %v588
        %v612 = vsub.f32 %v444, %v588
        %v613 = vsub.f32 %v445, %v588
        %v614 = vsub.f32 %v446, %v588
        %v615 = vsub.f32 %v447, %v588
        %v616 = vsub.f32 %v448, %v589
        %v617 = vsub.f32 %v449, %v589
        %v618 = vsub.f32 %v450, %v589
        %v619 = vsub.f32 %v451, %v589
        %v620 = vsub.f32 %v452, %v589
        %v621 = vsub.f32 %v453, %v589
        %v622 = vsub.f32 %v454, %v590
        %v623 = vsub.f32 %v455, %v590
        %v624 = vsub.f32 %v456, %v590
        %v625 = vsub.f32 %v457, %v590
        %v626 = vsub.f32 %v458, %v590
        %v627 = vsub.f32 %v459, %v590
        %v628 = vsub.f32 %v460, %v591
        %v629 = vsub.f32 %v461, %v591
        %v630 = vsub.f32 %v462, %v591
        %v631 = vsub.f32 %v463, %v591
        %v632 = vsub.f32 %v464, %v591
        %v633 = vsub.f32 %v465, %v591
        %v634 = vsub.f32 %v466, %v592
        %v635 = vsub.f32 %v467, %v592
        %v636 = vsub.f32 %v468, %v592
        %v637 = vsub.f32 %v469, %v592
        %v638 = vsub.f32 %v470, %v592
        %v639 = vsub.f32 %v471, %v592
        %v640 = vsub.f32 %v472, %v593
        %v641 = vsub.f32 %v473, %v593
        %v642 = vsub.f32 %v474, %v593
        %v643 = vsub.f32 %v475, %v593
        %v644 = vsub.f32 %v476, %v593
        %v645 = vsub.f32 %v477, %v593
        %v646 = vsub.f32 %v478, %v594
        %v647 = vsub.f32 %v479, %v594
        %v648 = vsub.f32 %v480, %v594
        %v649 = vsub.f32 %v481, %v594
        %v650 = vsub.f32 %v482, %v594
        %v651 = vsub.f32 %v483, %v594
        %v652 = vsub.f32 %v484, %v595
        %v653 = vsub.f32 %v485, %v595
        %v654 = vsub.f32 %v486, %v595
        %v655 = vsub.f32 %v487, %v595
        %v656 = vsub.f32 %v488, %v595
        %v657 = vsub.f32 %v489, %v595
        %v658 = vsub.f32 %v490, %v596
        %v659 = vsub.f32 %v491, %v596
        %v660 = vsub.f32 %v492, %v596
        %v661 = vsub.f32 %v493, %v596
        %v662 = vsub.f32 %v494, %v596
        %v663 = vsub.f32 %v495, %v596
        %v664 = vsub.f32 %v496, %v597
        %v665 = vsub.f32 %v497, %v597
        %v666 = vsub.f32 %v498, %v597
        %v667 = vsub.f32 %v499, %v597
        %v668 = vsub.f32 %v500, %v597
        %v669 = vsub.f32 %v501, %v597
        %v670 = vmul.f32 %v598, %v598
        %v671 = vmul.f32 %v599, %v599
        %v672 = vmul.f32 %v600, %v600
        %v673 = vmul.f32 %v601, %v601
        %v674 = vmul.f32 %v602, %v602
        %v675 = vmul.f32 %v603, %v603
        %v676 = vmul.f32 %v604, %v604
        %v677 = vmul.f32 %v605, %v605
        %v678 = vmul.f32 %v606, %v606
        %v679 = vmul.f32 %v607, %v607
        %v680 = vmul.f32 %v608, %v608
        %v681 = vmul.f32 %v609, %v609
        %v682 = vmul.f32 %v610, %v610
        %v683 = vmul.f32 %v611, %v611
        %v684 = vmul.f32 %v612, %v612
        %v685 = vmul.f32 %v613, %v613
        %v686 = vmul.f32 %v614, %v614
        %v687 = vmul.f32 %v615, %v615
        %v688 = vmul.f32 %v616, %v616
        %v689 = vmul.f32 %v617, %v617
        %v690 = vmul.f32 %v618, %v618
        %v691 = vmul.f32 %v619, %v619
        %v692 = vmul.f32 %v620, %v620
        %v693 = vmul.f32 %v621, %v621
        %v694 = vmul.f32 %v622, %v622
        %v695 = vmul.f32 %v623, %v623
        %v696 = vmul.f32 %v624, %v624
        %v697 = vmul.f32 %v625, %v625
        %v698 = vmul.f32 %v626, %v626
        %v699 = vmul.f32 %v627, %v627
        %v700 = vmul.f32 %v628, %v628
        %v701 = vmul.f32 %v629, %v629
        %v702 = vmul.f32 %v630, %v630
        %v703 = vmul.f32 %v631, %v631
        %v704 = vmul.f32 %v632, %v632
        %v705 = vmul.f32 %v633, %v633
        %v706 = vmul.f32 %v634, %v634
        %v707 = vmul.f32 %v635, %v635
        %v708 = vmul.f32 %v636, %v636
        %v709 = vmul.f32 %v637, %v637
        %v710 = vmul.f32 %v638, %v638
        %v711 = vmul.f32 %v639, %v639
        %v712 = vmul.f32 %v640, %v640
        %v713 = vmul.f32 %v641, %v641
        %v714 = vmul.f32 %v642, %v642
        %v715 = vmul.f32 %v643, %v643
        %v716 = vmul.f32 %v644, %v644
        %v717 = vmul.f32 %v645, %v645
        %v718 = vmul.f32 %v646, %v646
        %v719 = vmul.f32 %v647, %v647
        %v720 = vmul.f32 %v648, %v648
        %v721 = vmul.f32 %v649, %v649
        %v722 = vmul.f32 %v650, %v650
        %v723 = vmul.f32 %v651, %v651
        %v724 = vmul.f32 %v652, %v652
        %v725 = vmul.f32 %v653, %v653
        %v726 = vmul.f32 %v654, %v654
        %v727 = vmul.f32 %v655, %v655
        %v728 = vmul.f32 %v656, %v656
        %v729 = vmul.f32 %v657, %v657
        %v730 = vmul.f32 %v658, %v658
        %v731 = vmul.f32 %v659, %v659
        %v732 = vmul.f32 %v660, %v660
        %v733 = vmul.f32 %v661, %v661
        %v734 = vmul.f32 %v662, %v662
        %v735 = vmul.f32 %v663, %v663
        %v736 = vmul.f32 %v664, %v664
        %v737 = vmul.f32 %v665, %v665
        %v738 = vmul.f32 %v666, %v666
        %v739 = vmul.f32 %v667, %v667
        %v740 = vmul.f32 %v668, %v668
        %v741 = vmul.f32 %v669, %v669
        %v742 = vadd.f32 %v670, %v671
        %v743 = vadd.f32 %v742, %v672
        %v744 = vadd.f32 %v743, %v673
        %v745 = vadd.f32 %v744, %v674
        %v746 = vadd.f32 %v745, %v675
        %747 = vadd.xlane.f32.xlu0 %v746
        %v748 = vpop.xlane.xlu0 %747
        %v749 = vadd.f32 %v676, %v677
        %v750 = vadd.f32 %v749, %v678
        %v751 = vadd.f32 %v750, %v679
        %v752 = vadd.f32 %v751, %v680
        %v753 = vadd.f32 %v752, %v681
        %754 = vadd.xlane.f32.xlu0 %v753
        %v755 = vpop.xlane.xlu0 %754
        %v756 = vadd.f32 %v682, %v683
        %v757 = vadd.f32 %v756, %v684
        %v758 = vadd.f32 %v757, %v685
        %v759 = vadd.f32 %v758, %v686
        %v760 = vadd.f32 %v759, %v687
        %761 = vadd.xlane.f32.xlu0 %v760
        %v762 = vpop.xlane.xlu0 %761
        %v763 = vadd.f32 %v688, %v689
        %v764 = vadd.f32 %v763, %v690
        %v765 = vadd.f32 %v764, %v691
        %v766 = vadd.f32 %v765, %v692
        %v767 = vadd.f32 %v766, %v693
        %768 = vadd.xlane.f32.xlu0 %v767
        %v769 = vpop.xlane.xlu0 %768
        %v770 = vadd.f32 %v694, %v695
        %v771 = vadd.f32 %v770, %v696
        %v772 = vadd.f32 %v771, %v697
        %v773 = vadd.f32 %v772, %v698
        %v774 = vadd.f32 %v773, %v699
        %775 = vadd.xlane.f32.xlu0 %v774
        %v776 = vpop.xlane.xlu0 %775
        %v777 = vadd.f32 %v700, %v701
        %v778 = vadd.f32 %v777, %v702
        %v779 = vadd.f32 %v778, %v703
        %v780 = vadd.f32 %v779, %v704
        %v781 = vadd.f32 %v780, %v705
        %782 = vadd.xlane.f32.xlu0 %v781
        %v783 = vpop.xlane.xlu0 %782
        %v784 = vadd.f32 %v706, %v707
        %v785 = vadd.f32 %v784, %v708
        %v786 = vadd.f32 %v785, %v709
        %v787 = vadd.f32 %v786, %v710
        %v788 = vadd.f32 %v787, %v711
        %789 = vadd.xlane.f32.xlu0 %v788
        %v790 = vpop.xlane.xlu0 %789
        %v791 = vadd.f32 %v712, %v713
        %v792 = vadd.f32 %v791, %v714
        %v793 = vadd.f32 %v792, %v715
        %v794 = vadd.f32 %v793, %v716
        %v795 = vadd.f32 %v794, %v717
        %796 = vadd.xlane.f32.xlu0 %v795
        %v797 = vpop.xlane.xlu0 %796
        %v798 = vadd.f32 %v718, %v719
        %v799 = vadd.f32 %v798, %v720
        %v800 = vadd.f32 %v799, %v721
        %v801 = vadd.f32 %v800, %v722
        %v802 = vadd.f32 %v801, %v723
        %803 = vadd.xlane.f32.xlu0 %v802
        %v804 = vpop.xlane.xlu0 %803
        %v805 = vadd.f32 %v724, %v725
        %v806 = vadd.f32 %v805, %v726
        %v807 = vadd.f32 %v806, %v727
        %v808 = vadd.f32 %v807, %v728
        %v809 = vadd.f32 %v808, %v729
        %810 = vadd.xlane.f32.xlu0 %v809
        %v811 = vpop.xlane.xlu0 %810
        %v812 = vadd.f32 %v730, %v731
        %v813 = vadd.f32 %v812, %v732
        %v814 = vadd.f32 %v813, %v733
        %v815 = vadd.f32 %v814, %v734
        %v816 = vadd.f32 %v815, %v735
        %817 = vadd.xlane.f32.xlu0 %v816
        %v818 = vpop.xlane.xlu0 %817
        %v819 = vadd.f32 %v736, %v737
        %v820 = vadd.f32 %v819, %v738
        %v821 = vadd.f32 %v820, %v739
        %v822 = vadd.f32 %v821, %v740
        %v823 = vadd.f32 %v822, %v741
        %824 = vadd.xlane.f32.xlu0 %v823
        %v825 = vpop.xlane.xlu0 %824
        %v826 = vmul.f32 %v748, 0.0013020834
        %v827 = vmul.f32 %v755, 0.0013020834
        %v828 = vmul.f32 %v762, 0.0013020834
        %v829 = vmul.f32 %v769, 0.0013020834
        %v830 = vmul.f32 %v776, 0.0013020834
        %v831 = vmul.f32 %v783, 0.0013020834
        %v832 = vmul.f32 %v790, 0.0013020834
        %v833 = vmul.f32 %v797, 0.0013020834
        %v834 = vmul.f32 %v804, 0.0013020834
        %v835 = vmul.f32 %v811, 0.0013020834
        %v836 = vmul.f32 %v818, 0.0013020834
        %v837 = vmul.f32 %v825, 0.0013020834
        %v838 = vadd.f32 %v826, 1e-12
        %v839 = vadd.f32 %v827, 1e-12
        %v840 = vadd.f32 %v828, 1e-12
        %v841 = vadd.f32 %v829, 1e-12
        %v842 = vadd.f32 %v830, 1e-12
        %v843 = vadd.f32 %v831, 1e-12
        %v844 = vadd.f32 %v832, 1e-12
        %v845 = vadd.f32 %v833, 1e-12
        %v846 = vadd.f32 %v834, 1e-12
        %v847 = vadd.f32 %v835, 1e-12
        %v848 = vadd.f32 %v836, 1e-12
        %v849 = vadd.f32 %v837, 1e-12
        %v850 = vrsqrt.pop %v838
        %v851 = vrsqrt.pop %v839
        %v852 = vrsqrt.pop %v840
        %v853 = vrsqrt.pop %v841
        %v854 = vrsqrt.pop %v842
        %v855 = vrsqrt.pop %v843
        %v856 = vrsqrt.pop %v844
        %v857 = vrsqrt.pop %v845
        %v858 = vrsqrt.pop %v846
        %v859 = vrsqrt.pop %v847
        %v860 = vrsqrt.pop %v848
        %v861 = vrsqrt.pop %v849
        %v862 = vmul.f32 %v598, %v850
        %v863 = vmul.f32 %v599, %v850
        %v864 = vmul.f32 %v600, %v850
        %v865 = vmul.f32 %v601, %v850
        %v866 = vmul.f32 %v602, %v850
        %v867 = vmul.f32 %v603, %v850
        %v868 = vmul.f32 %v604, %v851
        %v869 = vmul.f32 %v605, %v851
        %v870 = vmul.f32 %v606, %v851
        %v871 = vmul.f32 %v607, %v851
        %v872 = vmul.f32 %v608, %v851
        %v873 = vmul.f32 %v609, %v851
        %v874 = vmul.f32 %v610, %v852
        %v875 = vmul.f32 %v611, %v852
        %v876 = vmul.f32 %v612, %v852
        %v877 = vmul.f32 %v613, %v852
        %v878 = vmul.f32 %v614, %v852
        %v879 = vmul.f32 %v615, %v852
        %v880 = vmul.f32 %v616, %v853
        %v881 = vmul.f32 %v617, %v853
        %v882 = vmul.f32 %v618, %v853
        %v883 = vmul.f32 %v619, %v853
        %v884 = vmul.f32 %v620, %v853
        %v885 = vmul.f32 %v621, %v853
        %v886 = vmul.f32 %v622, %v854
        %v887 = vmul.f32 %v623, %v854
        %v888 = vmul.f32 %v624, %v854
        %v889 = vmul.f32 %v625, %v854
        %v890 = vmul.f32 %v626, %v854
        %v891 = vmul.f32 %v627, %v854
        %v892 = vmul.f32 %v628, %v855
        %v893 = vmul.f32 %v629, %v855
        %v894 = vmul.f32 %v630, %v855
        %v895 = vmul.f32 %v631, %v855
        %v896 = vmul.f32 %v632, %v855
        %v897 = vmul.f32 %v633, %v855
        %v898 = vmul.f32 %v634, %v856
        %v899 = vmul.f32 %v635, %v856
        %v900 = vmul.f32 %v636, %v856
        %v901 = vmul.f32 %v637, %v856
        %v902 = vmul.f32 %v638, %v856
        %v903 = vmul.f32 %v639, %v856
        %v904 = vmul.f32 %v640, %v857
        %v905 = vmul.f32 %v641, %v857
        %v906 = vmul.f32 %v642, %v857
        %v907 = vmul.f32 %v643, %v857
        %v908 = vmul.f32 %v644, %v857
        %v909 = vmul.f32 %v645, %v857
        %v910 = vmul.f32 %v646, %v858
        %v911 = vmul.f32 %v647, %v858
        %v912 = vmul.f32 %v648, %v858
        %v913 = vmul.f32 %v649, %v858
        %v914 = vmul.f32 %v650, %v858
        %v915 = vmul.f32 %v651, %v858
        %v916 = vmul.f32 %v652, %v859
        %v917 = vmul.f32 %v653, %v859
        %v918 = vmul.f32 %v654, %v859
        %v919 = vmul.f32 %v655, %v859
        %v920 = vmul.f32 %v656, %v859
        %v921 = vmul.f32 %v657, %v859
        %v922 = vmul.f32 %v658, %v860
        %v923 = vmul.f32 %v659, %v860
        %v924 = vmul.f32 %v660, %v860
        %v925 = vmul.f32 %v661, %v860
        %v926 = vmul.f32 %v662, %v860
        %v927 = vmul.f32 %v663, %v860
        %v928 = vmul.f32 %v664, %v861
        %v929 = vmul.f32 %v665, %v861
        %v930 = vmul.f32 %v666, %v861
        %v931 = vmul.f32 %v667, %v861
        %v932 = vmul.f32 %v668, %v861
        %v933 = vmul.f32 %v669, %v861
        %v934 = vld [vmem:[#allocation7] sm:$0x3f]
        %v936 = vlaneseq
        %v937 = vshrl.u32 %v936, 7
        %v938 = vsub.s32 0, %v937
        %v939 = vrot.slane %v934, %v938
        %v940 = vlaneseq
        %v941 = vshrl.u32 %v940, 7
        %v942 = vsub.s32 1, %v941
        %v943 = vrot.slane %v934, %v942
        %v944 = vlaneseq
        %v945 = vshrl.u32 %v944, 7
        %v946 = vsub.s32 2, %v945
        %v947 = vrot.slane %v934, %v946
        %v948 = vlaneseq
        %v949 = vshrl.u32 %v948, 7
        %v950 = vsub.s32 3, %v949
        %v951 = vrot.slane %v934, %v950
        %v952 = vlaneseq
        %v953 = vshrl.u32 %v952, 7
        %v954 = vsub.s32 4, %v953
        %v955 = vrot.slane %v934, %v954
        %v956 = vlaneseq
        %v957 = vshrl.u32 %v956, 7
        %v958 = vsub.s32 5, %v957
        %v959 = vrot.slane %v934, %v958
        %v966 = vmul.f32 %v862, %v939
        %v967 = vmul.f32 %v863, %v943
        %v968 = vmul.f32 %v864, %v947
        %v969 = vmul.f32 %v865, %v951
        %v970 = vmul.f32 %v866, %v955
        %v971 = vmul.f32 %v867, %v959
        %v972 = vmul.f32 %v868, %v939
        %v973 = vmul.f32 %v869, %v943
        %v974 = vmul.f32 %v870, %v947
        %v975 = vmul.f32 %v871, %v951
        %v976 = vmul.f32 %v872, %v955
        %v977 = vmul.f32 %v873, %v959
        %v978 = vmul.f32 %v874, %v939
        %v979 = vmul.f32 %v875, %v943
        %v980 = vmul.f32 %v876, %v947
        %v981 = vmul.f32 %v877, %v951
        %v982 = vmul.f32 %v878, %v955
        %v983 = vmul.f32 %v879, %v959
        %v984 = vmul.f32 %v880, %v939
        %v985 = vmul.f32 %v881, %v943
        %v986 = vmul.f32 %v882, %v947
        %v987 = vmul.f32 %v883, %v951
        %v988 = vmul.f32 %v884, %v955
        %v989 = vmul.f32 %v885, %v959
        %v990 = vmul.f32 %v886, %v939
        %v991 = vmul.f32 %v887, %v943
        %v992 = vmul.f32 %v888, %v947
        %v993 = vmul.f32 %v889, %v951
        %v994 = vmul.f32 %v890, %v955
        %v995 = vmul.f32 %v891, %v959
        %v996 = vmul.f32 %v892, %v939
        %v997 = vmul.f32 %v893, %v943
        %v998 = vmul.f32 %v894, %v947
        %v999 = vmul.f32 %v895, %v951
        %v1000 = vmul.f32 %v896, %v955
        %v1001 = vmul.f32 %v897, %v959
        %v1002 = vmul.f32 %v898, %v939
        %v1003 = vmul.f32 %v899, %v943
        %v1004 = vmul.f32 %v900, %v947
        %v1005 = vmul.f32 %v901, %v951
        %v1006 = vmul.f32 %v902, %v955
        %v1007 = vmul.f32 %v903, %v959
        %v1008 = vmul.f32 %v904, %v939
        %v1009 = vmul.f32 %v905, %v943
        %v1010 = vmul.f32 %v906, %v947
        %v1011 = vmul.f32 %v907, %v951
        %v1012 = vmul.f32 %v908, %v955
        %v1013 = vmul.f32 %v909, %v959
        %v1014 = vmul.f32 %v910, %v939
        %v1015 = vmul.f32 %v911, %v943
        %v1016 = vmul.f32 %v912, %v947
        %v1017 = vmul.f32 %v913, %v951
        %v1018 = vmul.f32 %v914, %v955
        %v1019 = vmul.f32 %v915, %v959
        %v1020 = vmul.f32 %v916, %v939
        %v1021 = vmul.f32 %v917, %v943
        %v1022 = vmul.f32 %v918, %v947
        %v1023 = vmul.f32 %v919, %v951
        %v1024 = vmul.f32 %v920, %v955
        %v1025 = vmul.f32 %v921, %v959
        %v1026 = vmul.f32 %v922, %v939
        %v1027 = vmul.f32 %v923, %v943
        %v1028 = vmul.f32 %v924, %v947
        %v1029 = vmul.f32 %v925, %v951
        %v1030 = vmul.f32 %v926, %v955
        %v1031 = vmul.f32 %v927, %v959
        %v1032 = vmul.f32 %v928, %v939
        %v1033 = vmul.f32 %v929, %v943
        %v1034 = vmul.f32 %v930, %v947
        %v1035 = vmul.f32 %v931, %v951
        %v1036 = vmul.f32 %v932, %v955
        %v1037 = vmul.f32 %v933, %v959
        %v1038 = vld [vmem:[#allocation8] sm:$0x3f]
        %v1040 = vlaneseq
        %v1041 = vshrl.u32 %v1040, 7
        %v1042 = vsub.s32 0, %v1041
        %v1043 = vrot.slane %v1038, %v1042
        %v1044 = vlaneseq
        %v1045 = vshrl.u32 %v1044, 7
        %v1046 = vsub.s32 1, %v1045
        %v1047 = vrot.slane %v1038, %v1046
        %v1048 = vlaneseq
        %v1049 = vshrl.u32 %v1048, 7
        %v1050 = vsub.s32 2, %v1049
        %v1051 = vrot.slane %v1038, %v1050
        %v1052 = vlaneseq
        %v1053 = vshrl.u32 %v1052, 7
        %v1054 = vsub.s32 3, %v1053
        %v1055 = vrot.slane %v1038, %v1054
        %v1056 = vlaneseq
        %v1057 = vshrl.u32 %v1056, 7
        %v1058 = vsub.s32 4, %v1057
        %v1059 = vrot.slane %v1038, %v1058
        %v1060 = vlaneseq
        %v1061 = vshrl.u32 %v1060, 7
        %v1062 = vsub.s32 5, %v1061
        %v1063 = vrot.slane %v1038, %v1062
        %v1070 = vadd.f32 %v966, %v1043
        %v1071 = vadd.f32 %v967, %v1047
        %v1072 = vadd.f32 %v968, %v1051
        %v1073 = vadd.f32 %v969, %v1055
        %v1074 = vadd.f32 %v970, %v1059
        %v1075 = vadd.f32 %v971, %v1063
        %v1076 = vadd.f32 %v972, %v1043
        %v1077 = vadd.f32 %v973, %v1047
        %v1078 = vadd.f32 %v974, %v1051
        %v1079 = vadd.f32 %v975, %v1055
        %v1080 = vadd.f32 %v976, %v1059
        %v1081 = vadd.f32 %v977, %v1063
        %v1082 = vadd.f32 %v978, %v1043
        %v1083 = vadd.f32 %v979, %v1047
        %v1084 = vadd.f32 %v980, %v1051
        %v1085 = vadd.f32 %v981, %v1055
        %v1086 = vadd.f32 %v982, %v1059
        %v1087 = vadd.f32 %v983, %v1063
        %v1088 = vadd.f32 %v984, %v1043
        %v1089 = vadd.f32 %v985, %v1047
        %v1090 = vadd.f32 %v986, %v1051
        %v1091 = vadd.f32 %v987, %v1055
        %v1092 = vadd.f32 %v988, %v1059
        %v1093 = vadd.f32 %v989, %v1063
        %v1094 = vadd.f32 %v990, %v1043
        %v1095 = vadd.f32 %v991, %v1047
        %v1096 = vadd.f32 %v992, %v1051
        %v1097 = vadd.f32 %v993, %v1055
        %v1098 = vadd.f32 %v994, %v1059
        %v1099 = vadd.f32 %v995, %v1063
        %v1100 = vadd.f32 %v996, %v1043
        %v1101 = vadd.f32 %v997, %v1047
        %v1102 = vadd.f32 %v998, %v1051
        %v1103 = vadd.f32 %v999, %v1055
        %v1104 = vadd.f32 %v1000, %v1059
        %v1105 = vadd.f32 %v1001, %v1063
        %v1106 = vadd.f32 %v1002, %v1043
        %v1107 = vadd.f32 %v1003, %v1047
        %v1108 = vadd.f32 %v1004, %v1051
        %v1109 = vadd.f32 %v1005, %v1055
        %v1110 = vadd.f32 %v1006, %v1059
        %v1111 = vadd.f32 %v1007, %v1063
        %v1112 = vadd.f32 %v1008, %v1043
        %v1113 = vadd.f32 %v1009, %v1047
        %v1114 = vadd.f32 %v1010, %v1051
        %v1115 = vadd.f32 %v1011, %v1055
        %v1116 = vadd.f32 %v1012, %v1059
        %v1117 = vadd.f32 %v1013, %v1063
        %v1118 = vadd.f32 %v1014, %v1043
        %v1119 = vadd.f32 %v1015, %v1047
        %v1120 = vadd.f32 %v1016, %v1051
        %v1121 = vadd.f32 %v1017, %v1055
        %v1122 = vadd.f32 %v1018, %v1059
        %v1123 = vadd.f32 %v1019, %v1063
        %v1124 = vadd.f32 %v1020, %v1043
        %v1125 = vadd.f32 %v1021, %v1047
        %v1126 = vadd.f32 %v1022, %v1051
        %v1127 = vadd.f32 %v1023, %v1055
        %v1128 = vadd.f32 %v1024, %v1059
        %v1129 = vadd.f32 %v1025, %v1063
        %v1130 = vadd.f32 %v1026, %v1043
        %v1131 = vadd.f32 %v1027, %v1047
        %v1132 = vadd.f32 %v1028, %v1051
        %v1133 = vadd.f32 %v1029, %v1055
        %v1134 = vadd.f32 %v1030, %v1059
        %v1135 = vadd.f32 %v1031, %v1063
        %v1136 = vadd.f32 %v1032, %v1043
        %v1137 = vadd.f32 %v1033, %v1047
        %v1138 = vadd.f32 %v1034, %v1051
        %v1139 = vadd.f32 %v1035, %v1055
        %v1140 = vadd.f32 %v1036, %v1059
        %v1141 = vadd.f32 %v1037, %v1063
        %1142 = vst [vmem:[%s282] sm:$0xff] %v1070
        %1143 = vst [vmem:[%s282 + $0x8] sm:$0xff] %v1071
        %1144 = vst [vmem:[%s282 + $0x10] sm:$0xff] %v1072
        %1145 = vst [vmem:[%s282 + $0x18] sm:$0xff] %v1073
        %1146 = vst [vmem:[%s282 + $0x20] sm:$0xff] %v1074
        %1147 = vst [vmem:[%s282 + $0x28] sm:$0xff] %v1075
        %1148 = vst [vmem:[%s282 + $0x30] sm:$0xff] %v1076
        %1149 = vst [vmem:[%s282 + $0x38] sm:$0xff] %v1077
        %1150 = vst [vmem:[%s282 + $0x40] sm:$0xff] %v1078
        %1151 = vst [vmem:[%s282 + $0x48] sm:$0xff] %v1079
        %1152 = vst [vmem:[%s282 + $0x50] sm:$0xff] %v1080
        %1153 = vst [vmem:[%s282 + $0x58] sm:$0xff] %v1081
        %1154 = vst [vmem:[%s282 + $0x60] sm:$0xff] %v1082
        %1155 = vst [vmem:[%s282 + $0x68] sm:$0xff] %v1083
        %1156 = vst [vmem:[%s282 + $0x70] sm:$0xff] %v1084
        %1157 = vst [vmem:[%s282 + $0x78] sm:$0xff] %v1085
        %1158 = vst [vmem:[%s282 + $0x80] sm:$0xff] %v1086
        %1159 = vst [vmem:[%s282 + $0x88] sm:$0xff] %v1087
        %1160 = vst [vmem:[%s282 + $0x90] sm:$0xff] %v1088
        %1161 = vst [vmem:[%s282 + $0x98] sm:$0xff] %v1089
        %1162 = vst [vmem:[%s282 + $0xa0] sm:$0xff] %v1090
        %1163 = vst [vmem:[%s282 + $0xa8] sm:$0xff] %v1091
        %1164 = vst [vmem:[%s282 + $0xb0] sm:$0xff] %v1092
        %1165 = vst [vmem:[%s282 + $0xb8] sm:$0xff] %v1093
        %1166 = vst [vmem:[%s282 + $0xc0] sm:$0xff] %v1094
        %1167 = vst [vmem:[%s282 + $0xc8] sm:$0xff] %v1095
        %1168 = vst [vmem:[%s282 + $0xd0] sm:$0xff] %v1096
        %1169 = vst [vmem:[%s282 + $0xd8] sm:$0xff] %v1097
        %1170 = vst [vmem:[%s282 + $0xe0] sm:$0xff] %v1098
        %1171 = vst [vmem:[%s282 + $0xe8] sm:$0xff] %v1099
        %1172 = vst [vmem:[%s282 + $0xf0] sm:$0xff] %v1100
        %1173 = vst [vmem:[%s282 + $0xf8] sm:$0xff] %v1101
        %1174 = vst [vmem:[%s282 + $0x100] sm:$0xff] %v1102
        %1175 = vst [vmem:[%s282 + $0x108] sm:$0xff] %v1103
        %1176 = vst [vmem:[%s282 + $0x110] sm:$0xff] %v1104
        %1177 = vst [vmem:[%s282 + $0x118] sm:$0xff] %v1105
        %1178 = vst [vmem:[%s282 + $0x120] sm:$0xff] %v1106
        %1179 = vst [vmem:[%s282 + $0x128] sm:$0xff] %v1107
        %1180 = vst [vmem:[%s282 + $0x130] sm:$0xff] %v1108
        %1181 = vst [vmem:[%s282 + $0x138] sm:$0xff] %v1109
        %1182 = vst [vmem:[%s282 + $0x140] sm:$0xff] %v1110
        %1183 = vst [vmem:[%s282 + $0x148] sm:$0xff] %v1111
        %1184 = vst [vmem:[%s282 + $0x150] sm:$0xff] %v1112
        %1185 = vst [vmem:[%s282 + $0x158] sm:$0xff] %v1113
        %1186 = vst [vmem:[%s282 + $0x160] sm:$0xff] %v1114
        %1187 = vst [vmem:[%s282 + $0x168] sm:$0xff] %v1115
        %1188 = vst [vmem:[%s282 + $0x170] sm:$0xff] %v1116
        %1189 = vst [vmem:[%s282 + $0x178] sm:$0xff] %v1117
        %1190 = vst [vmem:[%s282 + $0x180] sm:$0xff] %v1118
        %1191 = vst [vmem:[%s282 + $0x188] sm:$0xff] %v1119
        %1192 = vst [vmem:[%s282 + $0x190] sm:$0xff] %v1120
        %1193 = vst [vmem:[%s282 + $0x198] sm:$0xff] %v1121
        %1194 = vst [vmem:[%s282 + $0x1a0] sm:$0xff] %v1122
        %1195 = vst [vmem:[%s282 + $0x1a8] sm:$0xff] %v1123
        %1196 = vst [vmem:[%s282 + $0x1b0] sm:$0xff] %v1124
        %1197 = vst [vmem:[%s282 + $0x1b8] sm:$0xff] %v1125
        %1198 = vst [vmem:[%s282 + $0x1c0] sm:$0xff] %v1126
        %1199 = vst [vmem:[%s282 + $0x1c8] sm:$0xff] %v1127
        %1200 = vst [vmem:[%s282 + $0x1d0] sm:$0xff] %v1128
        %1201 = vst [vmem:[%s282 + $0x1d8] sm:$0xff] %v1129
        %1202 = vst [vmem:[%s282 + $0x1e0] sm:$0xff] %v1130
        %1203 = vst [vmem:[%s282 + $0x1e8] sm:$0xff] %v1131
        %1204 = vst [vmem:[%s282 + $0x1f0] sm:$0xff] %v1132
        %1205 = vst [vmem:[%s282 + $0x1f8] sm:$0xff] %v1133
        %1206 = vst [vmem:[%s282 + $0x200] sm:$0xff] %v1134
        %1207 = vst [vmem:[%s282 + $0x208] sm:$0xff] %v1135
        %1208 = vst [vmem:[%s282 + $0x210] sm:$0xff] %v1136
        %1209 = vst [vmem:[%s282 + $0x218] sm:$0xff] %v1137
        %1210 = vst [vmem:[%s282 + $0x220] sm:$0xff] %v1138
        %1211 = vst [vmem:[%s282 + $0x228] sm:$0xff] %v1139
        %1212 = vst [vmem:[%s282 + $0x230] sm:$0xff] %v1140
        %1213 = vst [vmem:[%s282 + $0x238] sm:$0xff] %v1141
        %s1214 = sand.u32 %s127, 1
        %s1215 = scalar_lea.sflag [#allocation4], %s1214
        %s1216 = sand.u32 %s127, 1
        %s1217 = smul.addr %s1216, 576
        %s1218 = scalar_lea.vmem [#allocation10], %s1217
        // Predicated region
        $region53: #{tpu_custom_call.1} parent=35 // pred_check
          %p1219 = pneg %p137
        $region54: #{tpu_custom_call.1} parent=35 // pred_check_branch
          %1221 = sbr.rel (%p1219) target = $region56
        $region55: #{tpu_custom_call.1} parent=35 // pred_region
          %s1222 = smul.u32 12, %s25
          %s1224 = ssub.s32 9216, 9216
          %1225 = vsyncadd %s1215, %s1224
          %s1226 = smul.addr %s1222, 6
          %s1227 = smul.addr %s1226, 128
          %s1228 = scalar_lea.hbm %s4, %s1227
          %s1229 = sshll.u32 %s1218, 4
          %s1230 = int_to_ptr.vmem [resolvable:$true] %s1229
          %1235 = dma.vmem_to_hbm [thread:$0]  %s1230, 9216, %s1228, %s1215, 768, 768, 48
        $region56: #{tpu_custom_call.1} parent=35 // pred_fallthru
          _
      $region36: #{tpu_custom_call.1} parent=5 // pred_fallthru
        _
      %p1236 = scmp.le.s32.totalorder 2, %s20
      // Predicated region
      $region57: #{tpu_custom_call.1} parent=5 // pred_check
        %p1237 = pneg %p1236
      $region58: #{tpu_custom_call.1} parent=5 // pred_check_branch
        %1239 = sbr.rel (%p1237) target = $region60
      $region59: #{tpu_custom_call.1} parent=5 // pred_region
        %s1240 = ssub.s32 %s20, 2
        // Predicated region
        $region61: #{tpu_custom_call.1} parent=59 // pred_check
          %p1241 = pneg %p143
        $region62: #{tpu_custom_call.1} parent=59 // pred_check_branch
          %1243 = sbr.rel (%p1241) target = $region64
        $region63: #{tpu_custom_call.1} parent=59 // pred_region
          %s1244 = sand.u32 %s128, 1
          %s1245 = scalar_lea.sflag [#allocation4], %s1244
          %s1246 = sand.u32 %s128, 1
          %s1247 = smul.addr %s1246, 576
          %s1248 = scalar_lea.vmem [#allocation10], %s1247
          %1249 = dma.done %s1245, 9216
        $region64: #{tpu_custom_call.1} parent=59 // pred_fallthru
          _
      $region60: #{tpu_custom_call.1} parent=5 // pred_fallthru
        _
    $region6: #{tpu_custom_call.1} parent=1 // loop_footer
      %s24 = sadd.s32 1, %s20
    $region7: #{tpu_custom_call.1} parent=1 // loop_footer_branch
      %19 = sbr.rel target = $region3
    $region8: #{tpu_custom_call.1} parent=1 // loop_exit
      _
    %1250 = vsyncpa [#allocation3], 1
    %s1251 = scalar_lea.sflag [#allocation3], 1
    %1252 = vsyncpa %s1251, 1
    %1253 = vsyncpa [#allocation6], 1
    %s1254 = scalar_lea.sflag [#allocation6], 1
    %1255 = vsyncpa %s1254, 1
    %1256 = vsyncpa [#allocation9], 1
    %1257 = vsyncpa [#allocation4], 1
    %s1258 = scalar_lea.sflag [#allocation4], 1
    %1259 = vsyncpa %s1258, 1

</llo_original>
